<compile_context>
chip_gen: v6e
topology: v6e:2x2x1
jax: 0.10.0
libtpu: 0.0.40
codegen_flags: <defaults>
</compile_context>

<pallas_src>
import jax
import jax.numpy as jnp
from jax import lax
from jax.experimental import pallas as pl
from jax.experimental.pallas import tpu as pltpu


def _linear_kernel(x_ref, w_ref, b_ref, o_ref):
    # x_ref: (TB, D), w_ref: (D, Cp), b_ref: (1, Cp), o_ref: (TB, Cp)
    acc = lax.dot_general(
        x_ref[...], w_ref[...],
        dimension_numbers=(((1,), (0,)), ((), ())),   # (M,K) x (K,N) on the MXU
        preferred_element_type=jnp.float32,
    )
    o_ref[...] = (acc + b_ref[...]).astype(o_ref.dtype)


def prepare_linear_params(weight, bias, *, lane=128):
    """One-time parameter prep (do at init time, NOT per forward call).

    weight: (num_classes, input_size) PyTorch nn.Linear layout
    bias:   (num_classes,)
    returns weight_t (input_size, Cp), bias_p (1, Cp), with Cp = round_up(C, 128).
    Zero-padded class columns produce zero logits that the wrapper slices off.
    """
    C, D = weight.shape
    Cp = ((C + lane - 1) // lane) * lane
    weight_t = jnp.zeros((D, Cp), weight.dtype).at[:, :C].set(weight.T)
    bias_p = jnp.zeros((1, Cp), bias.dtype).at[0, :C].set(bias)
    return weight_t, bias_p


def logistic_regression_forward(x, weight_t, bias_p, *, num_classes, block_b=1024):
    """
    x:        (B, C, H, W) float32 (NCHW, same as PyTorch)
    weight_t: (input_size, Cp) float32  -- from prepare_linear_params
    bias_p:   (1, Cp) float32           -- from prepare_linear_params
    returns   (B, num_classes) float32 logits
    """
    B = x.shape[0]
    x_flat = x.reshape(B, -1)                    # (B, D) -- glue reshape
    D = x_flat.shape[1]
    Dw, Cp = weight_t.shape
    assert Dw == D, f"weight input_size {Dw} != flattened x dim {D}"

    # --- Tile the batch axis. No padding: Pallas masks the boundary block.
    if B <= 8:
        TB = B                                   # single block; full-dim exemption
    else:
        # Aim for >=2 grid steps so both v7x TensorCores get work on the
        # "parallel" axis; keep TB a multiple of 8 (sublane rule).
        half = ((-(-B // 2)) + 7) // 8 * 8
        TB = min(block_b, half)
    grid = (pl.cdiv(B, TB),)

    # --- Only raise the scoped VMEM limit when the footprint actually needs it
    #     (v5e default is 16 MiB); keep under v7x's 64 MiB physical VMEM.
    est_vmem = 2 * 4 * (TB * D + D * Cp + Cp + TB * Cp)   # double-buffered, f32
    compiler_kwargs = {"dimension_semantics": ("parallel",)}
    if est_vmem > 12 * 1024 * 1024:
        compiler_kwargs["vmem_limit_bytes"] = min(int(est_vmem * 1.25), 56 * 1024 * 1024)

    out = pl.pallas_call(
        _linear_kernel,
        out_shape=jax.ShapeDtypeStruct((B, Cp), x.dtype),
        grid_spec=pl.GridSpec(
            grid=grid,
            in_specs=[
                pl.BlockSpec((TB, D), lambda i: (i, 0)),   # x: streamed per tile
                pl.BlockSpec((D, Cp), lambda i: (0, 0)),   # weight: resident
                pl.BlockSpec((1, Cp), lambda i: (0, 0)),   # bias: resident
            ],
            out_specs=pl.BlockSpec((TB, Cp), lambda i: (i, 0)),
        ),
        compiler_params=pltpu.CompilerParams(**compiler_kwargs),
        cost_estimate=pl.CostEstimate(
            flops=2 * B * D * Cp,
            transcendentals=0,
            bytes_accessed=B * D * 4 + D * Cp * 4 + Cp * 4 + B * Cp * 4,
        ),
    )(x_flat, weight_t, bias_p)

    # Slice off the class padding only (no batch padding exists).
    return out[:, :num_classes]


if __name__ == "__main__":
    key = jax.random.PRNGKey(0)
    k_x, k_w, k_b = jax.random.split(key, 3)

    # Small shapes consistent with the module: forward() flattens x, so
    # input_size = 4*16*16 = 1024; num_classes = 10.
    B, Cin, H, W = 2, 4, 16, 16
    input_size = Cin * H * W
    num_classes = 10

    x = jax.random.normal(k_x, (B, Cin, H, W), dtype=jnp.float32)

    # Deterministic nn.Linear-style init: U(-1/sqrt(in), 1/sqrt(in)).
    bound = 1.0 / (input_size ** 0.5)
    weight = jax.random.uniform(
        k_w, (num_classes, input_size), minval=-bound, maxval=bound,
        dtype=jnp.float32)
    bias = jax.random.uniform(
        k_b, (num_classes,), minval=-bound, maxval=bound, dtype=jnp.float32)

    # One-time parameter prep (outside the per-call path).
    weight_t, bias_p = prepare_linear_params(weight, bias)

    fwd = jax.jit(logistic_regression_forward,
                  static_argnames=("num_classes", "block_b"))
    out = fwd(x, weight_t, bias_p, num_classes=num_classes)
    jax.block_until_ready(out)

    # Reference check in plain JAX (same math as the PyTorch module).
    ref = x.reshape(B, -1) @ weight.T + bias
    assert out.shape == (B, num_classes)
    assert jnp.allclose(out, ref, atol=1e-4, rtol=1e-4)

    print("KERNEL_OK")
</pallas_src>

<mosaic_0001>
module attributes {stable_mosaic.version = 11 : i64} {
  func.func @_linear_kernel(%arg0: i32, %arg1: memref<2x1024xf32, #tpu.memory_space<vmem>>, %arg2: memref<1024x128xf32, #tpu.memory_space<vmem>>, %arg3: memref<1x128xf32, #tpu.memory_space<vmem>>, %arg4: memref<2x128xf32, #tpu.memory_space<vmem>>) attributes {dimension_semantics = [#tpu.dimension_semantics<parallel>], iteration_bounds = array<i64: 1>, scalar_prefetch = 0 : i64, scratch_operands = 0 : i64, tpu.core_type = #tpu.core_type<tc>, window_params = [{transform_indices = @transform_0, window_bounds = array<i64: 2, 1024>}, {pipeline_mode = #tpu.pipeline_mode<synchronous>, transform_indices = @transform_1, window_bounds = array<i64: 1024, 128>}, {pipeline_mode = #tpu.pipeline_mode<synchronous>, transform_indices = @transform_2, window_bounds = array<i64: 1, 128>}, {transform_indices = @transform_3, window_bounds = array<i64: 2, 128>}]} {
    %c0 = arith.constant 0 : index
    %c0_0 = arith.constant 0 : index
    %0 = vector.load %arg1[%c0, %c0_0] : memref<2x1024xf32, #tpu.memory_space<vmem>>, vector<2x1024xf32>
    %c0_1 = arith.constant 0 : index
    %c0_2 = arith.constant 0 : index
    %1 = vector.load %arg2[%c0_1, %c0_2] : memref<1024x128xf32, #tpu.memory_space<vmem>>, vector<1024x128xf32>
    %cst = arith.constant dense<0.000000e+00> : vector<2x128xf32>
    %2 = tpu.matmul %0, %1, %cst {dimension_numbers = #tpu.dot_dimension_numbers<[1], [0], [0], [1], [0, 0, 1, 1], [], []>} : vector<2x1024xf32>, vector<1024x128xf32>, vector<2x128xf32> -> vector<2x128xf32>
    %c0_3 = arith.constant 0 : index
    %c0_4 = arith.constant 0 : index
    %3 = vector.load %arg3[%c0_3, %c0_4] : memref<1x128xf32, #tpu.memory_space<vmem>>, vector<1x128xf32>
    %4 = vector.broadcast %3 : vector<1x128xf32> to vector<2x128xf32>
    %5 = arith.addf %2, %4 : vector<2x128xf32>
    %c0_5 = arith.constant 0 : index
    %c0_6 = arith.constant 0 : index
    %6 = vector.load %arg4[%c0_5, %c0_6] : memref<2x128xf32, #tpu.memory_space<vmem>>, vector<2x128xf32>
    tpu.vector_store %arg4[%c0_5, %c0_6], %5 {strides = array<i32>} : memref<2x128xf32, #tpu.memory_space<vmem>>, vector<2x128xf32>,
    return
  }
  func.func @transform_0(%arg0: i32) -> (i32, i32) {
    %c0_i32 = arith.constant 0 : i32
    %c0_i32_0 = arith.constant 0 : i32
    return %arg0, %c0_i32 : i32, i32
  }
  func.func @transform_1(%arg0: i32) -> (i32, i32) {
    %c0_i32 = arith.constant 0 : i32
    %c0_i32_0 = arith.constant 0 : i32
    %c0_i32_1 = arith.constant 0 : i32
    return %c0_i32, %c0_i32_0 : i32, i32
  }
  func.func @transform_2(%arg0: i32) -> (i32, i32) {
    %c0_i32 = arith.constant 0 : i32
    %c0_i32_0 = arith.constant 0 : i32
    %c0_i32_1 = arith.constant 0 : i32
    return %c0_i32, %c0_i32_0 : i32, i32
  }
  func.func @transform_3(%arg0: i32) -> (i32, i32) {
    %c0_i32 = arith.constant 0 : i32
    %c0_i32_0 = arith.constant 0 : i32
    return %arg0, %c0_i32 : i32, i32
  }
}

</mosaic_0001>

<llo_original>
// kernel: logistic_regression_forward.1
$region0: #{logistic_regression_forward.1}
  #allocation0 [shape = 'u32[]', space=smem, size = 0x4, offset = 0x4, fixed_abs, tag = 'smem constant byte address 0x4 - core index']
  #allocation1 [shape = 'u32[144,128]{1,0:T(1,128)}', space=vmem, size = 0x12000, scoped, tag = 'internal scratch']
  %s0 = inlined_call_operand.vmem [shape: f32[2,1024], index: 0, kind: input, shape index: {}]
  %s1 = inlined_call_operand.hbm [shape: f32[1024,128], index: 1, kind: input, shape index: {}]
  %s2 = inlined_call_operand.vmem [shape: f32[1,128], index: 2, kind: input, shape index: {}]
  %s3 = inlined_call_operand.hbm [shape: f32[2,128], index: 3, kind: output, shape index: {}]
  %s4 = sld [smem:[#allocation0]]
  $region26: #{logistic_regression_forward.1} parent=0
    _
  %s6 = ssub.s32 1, %s4
  %s7 = scalar_select 0, %s6, %s4
  $region1: #{logistic_regression_forward.1} parent=0
    #allocation2 [shape = 'u8[524288]{0}', space=vmem, size = 0x80000, scoped, tag = 'input window, operand 1, single buffered']
    #allocation3 [shape = 's32[1]{0}', space=sflag, size = 0x4, scoped, tag = 'scoped memory for logistic_regression_forward.1']
    #allocation4 [shape = 's32[1]{0}', space=sflag, size = 0x4, scoped, tag = 'scoped memory for logistic_regression_forward.1']
    #allocation5 [shape = 'u8[1024]{0}', space=vmem, size = 0x400, scoped, tag = 'output window, operand 0, single buffered']
    %8 = vsyncpa [#allocation3], 0
    %9 = vsyncpa [#allocation4], 0
    // Predicated region
    $region2: #{logistic_regression_forward.1} parent=1 // pred_check
      _
    $region3: #{logistic_regression_forward.1} parent=1 // pred_check_branch
      %11 = sbr.rel (0) target = $region5
    $region4: #{logistic_regression_forward.1} parent=1 // pred_region
      _
    $region5: #{logistic_regression_forward.1} parent=1 // pred_fallthru
      _
    // Predicated region
    $region6: #{logistic_regression_forward.1} parent=1 // pred_check
      _
    $region7: #{logistic_regression_forward.1} parent=1 // pred_check_branch
      %13 = sbr.rel (0) target = $region9
    $region8: #{logistic_regression_forward.1} parent=1 // pred_region
      %s15 = ssub.s32 16384, 16384
      %16 = vsyncadd [#allocation3], %s15
      %s17 = sshll.u32 [#allocation2], 4
      %s18 = int_to_ptr.vmem [resolvable:$true] %s17
      %23 = dma.hbm_to_vmem [thread:$0]  %s1, 16384, %s18, [#allocation3], 128, 128, 8
    $region9: #{logistic_regression_forward.1} parent=1 // pred_fallthru
      _
    // Predicated region
    $region10: #{logistic_regression_forward.1} parent=1 // pred_check
      _
    $region11: #{logistic_regression_forward.1} parent=1 // pred_check_branch
      %25 = sbr.rel (0) target = $region13
    $region12: #{logistic_regression_forward.1} parent=1 // pred_region
      _
    $region13: #{logistic_regression_forward.1} parent=1 // pred_fallthru
      _
    // Predicated region
    $region14: #{logistic_regression_forward.1} parent=1 // pred_check
      _
    $region15: #{logistic_regression_forward.1} parent=1 // pred_check_branch
      %27 = sbr.rel (0) target = $region17
    $region16: #{logistic_regression_forward.1} parent=1 // pred_region
      %28 = dma.done [#allocation3], 16384
    $region17: #{logistic_regression_forward.1} parent=1 // pred_fallthru
      _
    %v29 = vld [vmem:[%s0] sm:$0xff]
    %v30 = vld [vmem:[%s0 + $0x8] sm:$0xff]
    %v31 = vld [vmem:[#allocation2] sm:$0xff]
    %v32 = vld [vmem:[#allocation2 + $0x8] sm:$0xff]
    %v33 = vld [vmem:[#allocation2 + $0x10] sm:$0xff]
    %v34 = vld [vmem:[#allocation2 + $0x18] sm:$0xff]
    %v35 = vld [vmem:[#allocation2 + $0x20] sm:$0xff]
    %v36 = vld [vmem:[#allocation2 + $0x28] sm:$0xff]
    %v37 = vld [vmem:[#allocation2 + $0x30] sm:$0xff]
    %v38 = vld [vmem:[#allocation2 + $0x38] sm:$0xff]
    %v39 = vld [vmem:[#allocation2 + $0x40] sm:$0xff]
    %v40 = vld [vmem:[#allocation2 + $0x48] sm:$0xff]
    %v41 = vld [vmem:[#allocation2 + $0x50] sm:$0xff]
    %v42 = vld [vmem:[#allocation2 + $0x58] sm:$0xff]
    %v43 = vld [vmem:[#allocation2 + $0x60] sm:$0xff]
    %v44 = vld [vmem:[#allocation2 + $0x68] sm:$0xff]
    %v45 = vld [vmem:[#allocation2 + $0x70] sm:$0xff]
    %v46 = vld [vmem:[#allocation2 + $0x78] sm:$0xff]
    %v47 = vld [vmem:[#allocation2 + $0x80] sm:$0xff]
    %v48 = vld [vmem:[#allocation2 + $0x88] sm:$0xff]
    %v49 = vld [vmem:[#allocation2 + $0x90] sm:$0xff]
    %v50 = vld [vmem:[#allocation2 + $0x98] sm:$0xff]
    %v51 = vld [vmem:[#allocation2 + $0xa0] sm:$0xff]
    %v52 = vld [vmem:[#allocation2 + $0xa8] sm:$0xff]
    %v53 = vld [vmem:[#allocation2 + $0xb0] sm:$0xff]
    %v54 = vld [vmem:[#allocation2 + $0xb8] sm:$0xff]
    %v55 = vld [vmem:[#allocation2 + $0xc0] sm:$0xff]
    %v56 = vld [vmem:[#allocation2 + $0xc8] sm:$0xff]
    %v57 = vld [vmem:[#allocation2 + $0xd0] sm:$0xff]
    %v58 = vld [vmem:[#allocation2 + $0xd8] sm:$0xff]
    %v59 = vld [vmem:[#allocation2 + $0xe0] sm:$0xff]
    %v60 = vld [vmem:[#allocation2 + $0xe8] sm:$0xff]
    %v61 = vld [vmem:[#allocation2 + $0xf0] sm:$0xff]
    %v62 = vld [vmem:[#allocation2 + $0xf8] sm:$0xff]
    %v63 = vld [vmem:[#allocation2 + $0x100] sm:$0xff]
    %v64 = vld [vmem:[#allocation2 + $0x108] sm:$0xff]
    %v65 = vld [vmem:[#allocation2 + $0x110] sm:$0xff]
    %v66 = vld [vmem:[#allocation2 + $0x118] sm:$0xff]
    %v67 = vld [vmem:[#allocation2 + $0x120] sm:$0xff]
    %v68 = vld [vmem:[#allocation2 + $0x128] sm:$0xff]
    %v69 = vld [vmem:[#allocation2 + $0x130] sm:$0xff]
    %v70 = vld [vmem:[#allocation2 + $0x138] sm:$0xff]
    %v71 = vld [vmem:[#allocation2 + $0x140] sm:$0xff]
    %v72 = vld [vmem:[#allocation2 + $0x148] sm:$0xff]
    %v73 = vld [vmem:[#allocation2 + $0x150] sm:$0xff]
    %v74 = vld [vmem:[#allocation2 + $0x158] sm:$0xff]
    %v75 = vld [vmem:[#allocation2 + $0x160] sm:$0xff]
    %v76 = vld [vmem:[#allocation2 + $0x168] sm:$0xff]
    %v77 = vld [vmem:[#allocation2 + $0x170] sm:$0xff]
    %v78 = vld [vmem:[#allocation2 + $0x178] sm:$0xff]
    %v79 = vld [vmem:[#allocation2 + $0x180] sm:$0xff]
    %v80 = vld [vmem:[#allocation2 + $0x188] sm:$0xff]
    %v81 = vld [vmem:[#allocation2 + $0x190] sm:$0xff]
    %v82 = vld [vmem:[#allocation2 + $0x198] sm:$0xff]
    %v83 = vld [vmem:[#allocation2 + $0x1a0] sm:$0xff]
    %v84 = vld [vmem:[#allocation2 + $0x1a8] sm:$0xff]
    %v85 = vld [vmem:[#allocation2 + $0x1b0] sm:$0xff]
    %v86 = vld [vmem:[#allocation2 + $0x1b8] sm:$0xff]
    %v87 = vld [vmem:[#allocation2 + $0x1c0] sm:$0xff]
    %v88 = vld [vmem:[#allocation2 + $0x1c8] sm:$0xff]
    %v89 = vld [vmem:[#allocation2 + $0x1d0] sm:$0xff]
    %v90 = vld [vmem:[#allocation2 + $0x1d8] sm:$0xff]
    %v91 = vld [vmem:[#allocation2 + $0x1e0] sm:$0xff]
    %v92 = vld [vmem:[#allocation2 + $0x1e8] sm:$0xff]
    %v93 = vld [vmem:[#allocation2 + $0x1f0] sm:$0xff]
    %v94 = vld [vmem:[#allocation2 + $0x1f8] sm:$0xff]
    %v95 = vld [vmem:[#allocation2 + $0x200] sm:$0xff]
    %v96 = vld [vmem:[#allocation2 + $0x208] sm:$0xff]
    %v97 = vld [vmem:[#allocation2 + $0x210] sm:$0xff]
    %v98 = vld [vmem:[#allocation2 + $0x218] sm:$0xff]
    %v99 = vld [vmem:[#allocation2 + $0x220] sm:$0xff]
    %v100 = vld [vmem:[#allocation2 + $0x228] sm:$0xff]
    %v101 = vld [vmem:[#allocation2 + $0x230] sm:$0xff]
    %v102 = vld [vmem:[#allocation2 + $0x238] sm:$0xff]
    %v103 = vld [vmem:[#allocation2 + $0x240] sm:$0xff]
    %v104 = vld [vmem:[#allocation2 + $0x248] sm:$0xff]
    %v105 = vld [vmem:[#allocation2 + $0x250] sm:$0xff]
    %v106 = vld [vmem:[#allocation2 + $0x258] sm:$0xff]
    %v107 = vld [vmem:[#allocation2 + $0x260] sm:$0xff]
    %v108 = vld [vmem:[#allocation2 + $0x268] sm:$0xff]
    %v109 = vld [vmem:[#allocation2 + $0x270] sm:$0xff]
    %v110 = vld [vmem:[#allocation2 + $0x278] sm:$0xff]
    %v111 = vld [vmem:[#allocation2 + $0x280] sm:$0xff]
    %v112 = vld [vmem:[#allocation2 + $0x288] sm:$0xff]
    %v113 = vld [vmem:[#allocation2 + $0x290] sm:$0xff]
    %v114 = vld [vmem:[#allocation2 + $0x298] sm:$0xff]
    %v115 = vld [vmem:[#allocation2 + $0x2a0] sm:$0xff]
    %v116 = vld [vmem:[#allocation2 + $0x2a8] sm:$0xff]
    %v117 = vld [vmem:[#allocation2 + $0x2b0] sm:$0xff]
    %v118 = vld [vmem:[#allocation2 + $0x2b8] sm:$0xff]
    %v119 = vld [vmem:[#allocation2 + $0x2c0] sm:$0xff]
    %v120 = vld [vmem:[#allocation2 + $0x2c8] sm:$0xff]
    %v121 = vld [vmem:[#allocation2 + $0x2d0] sm:$0xff]
    %v122 = vld [vmem:[#allocation2 + $0x2d8] sm:$0xff]
    %v123 = vld [vmem:[#allocation2 + $0x2e0] sm:$0xff]
    %v124 = vld [vmem:[#allocation2 + $0x2e8] sm:$0xff]
    %v125 = vld [vmem:[#allocation2 + $0x2f0] sm:$0xff]
    %v126 = vld [vmem:[#allocation2 + $0x2f8] sm:$0xff]
    %v127 = vld [vmem:[#allocation2 + $0x300] sm:$0xff]
    %v128 = vld [vmem:[#allocation2 + $0x308] sm:$0xff]
    %v129 = vld [vmem:[#allocation2 + $0x310] sm:$0xff]
    %v130 = vld [vmem:[#allocation2 + $0x318] sm:$0xff]
    %v131 = vld [vmem:[#allocation2 + $0x320] sm:$0xff]
    %v132 = vld [vmem:[#allocation2 + $0x328] sm:$0xff]
    %v133 = vld [vmem:[#allocation2 + $0x330] sm:$0xff]
    %v134 = vld [vmem:[#allocation2 + $0x338] sm:$0xff]
    %v135 = vld [vmem:[#allocation2 + $0x340] sm:$0xff]
    %v136 = vld [vmem:[#allocation2 + $0x348] sm:$0xff]
    %v137 = vld [vmem:[#allocation2 + $0x350] sm:$0xff]
    %v138 = vld [vmem:[#allocation2 + $0x358] sm:$0xff]
    %v139 = vld [vmem:[#allocation2 + $0x360] sm:$0xff]
    %v140 = vld [vmem:[#allocation2 + $0x368] sm:$0xff]
    %v141 = vld [vmem:[#allocation2 + $0x370] sm:$0xff]
    %v142 = vld [vmem:[#allocation2 + $0x378] sm:$0xff]
    %v143 = vld [vmem:[#allocation2 + $0x380] sm:$0xff]
    %v144 = vld [vmem:[#allocation2 + $0x388] sm:$0xff]
    %v145 = vld [vmem:[#allocation2 + $0x390] sm:$0xff]
    %v146 = vld [vmem:[#allocation2 + $0x398] sm:$0xff]
    %v147 = vld [vmem:[#allocation2 + $0x3a0] sm:$0xff]
    %v148 = vld [vmem:[#allocation2 + $0x3a8] sm:$0xff]
    %v149 = vld [vmem:[#allocation2 + $0x3b0] sm:$0xff]
    %v150 = vld [vmem:[#allocation2 + $0x3b8] sm:$0xff]
    %v151 = vld [vmem:[#allocation2 + $0x3c0] sm:$0xff]
    %v152 = vld [vmem:[#allocation2 + $0x3c8] sm:$0xff]
    %v153 = vld [vmem:[#allocation2 + $0x3d0] sm:$0xff]
    %v154 = vld [vmem:[#allocation2 + $0x3d8] sm:$0xff]
    %v155 = vld [vmem:[#allocation2 + $0x3e0] sm:$0xff]
    %v156 = vld [vmem:[#allocation2 + $0x3e8] sm:$0xff]
    %v157 = vld [vmem:[#allocation2 + $0x3f0] sm:$0xff]
    %v158 = vld [vmem:[#allocation2 + $0x3f8] sm:$0xff]
    %v159 = vld [vmem:[%s2] sm:$0x1]
    %v161 = vlaneseq
    %v162 = vshrl.u32 %v161, 7
    %v163 = vsub.s32 0, %v162
    %v164 = vrot.slane %v159, %v163
    %v168 = vcombine.high %v29, %v29
    %v170 = vunpack.c.l.s4 1983009808
    %v171 = vunpack.c.0.s8 %v170
    %v172 = vlaneseq
    %v173 = vshrl.u32 %v172, 7
    %v174 = vsub.s32 %v171, %v173
    %v175 = vrot.slane %v29, %v174
    %v177 = vunpack.c.l.s4 1983009808
    %v178 = vunpack.c.0.s8 %v177
    %v179 = vlaneseq
    %v180 = vshrl.u32 %v179, 7
    %v181 = vsub.s32 %v178, %v180
    %v182 = vrot.slane %v168, %v181
    %v183 = vcombine.high %v175, %v175
    %v184 = vcombine.high %v182, %v182
    %v185 = vcombine.high %v30, %v30
    %v187 = vunpack.c.l.s4 1983009808
    %v188 = vunpack.c.0.s8 %v187
    %v189 = vlaneseq
    %v190 = vshrl.u32 %v189, 7
    %v191 = vsub.s32 %v188, %v190
    %v192 = vrot.slane %v30, %v191
    %v194 = vunpack.c.l.s4 1983009808
    %v195 = vunpack.c.0.s8 %v194
    %v196 = vlaneseq
    %v197 = vshrl.u32 %v196, 7
    %v198 = vsub.s32 %v195, %v197
    %v199 = vrot.slane %v185, %v198
    %v200 = vcombine.high %v192, %v192
    %v201 = vcombine.high %v199, %v199
    %210 = vmatprep.subr.mxu0 0.0
    %211 = vmatpush1.msra.mxu0 %v46
    %212 = vmatprep.subr.mxu0 0.0
    %213 = vmatpush1.msra.mxu0 %v45
    %214 = vmatprep.subr.mxu0 0.0
    %215 = vmatpush1.msra.mxu0 %v44
    %216 = vmatprep.subr.mxu0 0.0
    %217 = vmatpush1.msra.mxu0 %v43
    %218 = vmatprep.subr.mxu0 0.0
    %219 = vmatpush1.msra.mxu0 %v42
    %220 = vmatprep.subr.mxu0 0.0
    %221 = vmatpush1.msra.mxu0 %v41
    %222 = vmatprep.subr.mxu0 0.0
    %223 = vmatpush1.msra.mxu0 %v40
    %224 = vmatprep.subr.mxu0 0.0
    %225 = vmatpush1.msra.mxu0 %v39
    %226 = vmatprep.subr.mxu0 0.0
    %227 = vmatpush1.msra.mxu0 %v38
    %228 = vmatprep.subr.mxu0 0.0
    %229 = vmatpush1.msra.mxu0 %v37
    %230 = vmatprep.subr.mxu0 0.0
    %231 = vmatpush1.msra.mxu0 %v36
    %232 = vmatprep.subr.mxu0 0.0
    %233 = vmatpush1.msra.mxu0 %v35
    %234 = vmatprep.subr.mxu0 0.0
    %235 = vmatpush1.msra.mxu0 %v34
    %236 = vmatprep.subr.mxu0 0.0
    %237 = vmatpush1.msra.mxu0 %v33
    %238 = vmatprep.subr.mxu0 0.0
    %239 = vmatpush1.msra.mxu0 %v32
    %240 = vmatprep.subr.mxu0 0.0
    %241 = vmatpush1.msra.mxu0 %v31
    %242 = vmatprep.subr.mxu0 0.0
    %243 = vmatpush2.msra.mxu0 %v62
    %244 = vmatprep.subr.mxu0 0.0
    %245 = vmatpush2.msra.mxu0 %v61
    %246 = vmatprep.subr.mxu0 0.0
    %247 = vmatpush2.msra.mxu0 %v60
    %248 = vmatprep.subr.mxu0 0.0
    %249 = vmatpush2.msra.mxu0 %v59
    %250 = vmatprep.subr.mxu0 0.0
    %251 = vmatpush2.msra.mxu0 %v58
    %252 = vmatprep.subr.mxu0 0.0
    %253 = vmatpush2.msra.mxu0 %v57
    %254 = vmatprep.subr.mxu0 0.0
    %255 = vmatpush2.msra.mxu0 %v56
    %256 = vmatprep.subr.mxu0 0.0
    %257 = vmatpush2.msra.mxu0 %v55
    %258 = vmatprep.subr.mxu0 0.0
    %259 = vmatpush2.msra.mxu0 %v54
    %260 = vmatprep.subr.mxu0 0.0
    %261 = vmatpush2.msra.mxu0 %v53
    %262 = vmatprep.subr.mxu0 0.0
    %263 = vmatpush2.msra.mxu0 %v52
    %264 = vmatprep.subr.mxu0 0.0
    %265 = vmatpush2.msra.mxu0 %v51
    %266 = vmatprep.subr.mxu0 0.0
    %267 = vmatpush2.msra.mxu0 %v50
    %268 = vmatprep.subr.mxu0 0.0
    %269 = vmatpush2.msra.mxu0 %v49
    %270 = vmatprep.subr.mxu0 0.0
    %271 = vmatpush2.msra.mxu0 %v48
    %272 = vmatprep.subr.mxu0 0.0
    %273 = vmatpush2.msra.mxu0 %v47
    %274 = vmatprep.mubr.f32.mxu0 %v183
    %275 = vmatmul.mubr.f32.gmra.mxu0 %v175
    %v276 = vpop.f32.mrf.mxu0
    %v277 = vadd.f32 %v164, %v276
    %v278 = vpop.f32.mrf.mxu0
    %279 = vdwg.mxu0
    %280 = vmatprep.subr.mxu0 0.0
    %281 = vmatpush1.msra.mxu0 %v78
    %282 = vmatprep.subr.mxu0 0.0
    %283 = vmatpush1.msra.mxu0 %v77
    %284 = vmatprep.subr.mxu0 0.0
    %285 = vmatpush1.msra.mxu0 %v76
    %286 = vmatprep.subr.mxu0 0.0
    %287 = vmatpush1.msra.mxu0 %v75
    %288 = vmatprep.subr.mxu0 0.0
    %289 = vmatpush1.msra.mxu0 %v74
    %290 = vmatprep.subr.mxu0 0.0
    %291 = vmatpush1.msra.mxu0 %v73
    %292 = vmatprep.subr.mxu0 0.0
    %293 = vmatpush1.msra.mxu0 %v72
    %294 = vmatprep.subr.mxu0 0.0
    %295 = vmatpush1.msra.mxu0 %v71
    %296 = vmatprep.subr.mxu0 0.0
    %297 = vmatpush1.msra.mxu0 %v70
    %298 = vmatprep.subr.mxu0 0.0
    %299 = vmatpush1.msra.mxu0 %v69
    %300 = vmatprep.subr.mxu0 0.0
    %301 = vmatpush1.msra.mxu0 %v68
    %302 = vmatprep.subr.mxu0 0.0
    %303 = vmatpush1.msra.mxu0 %v67
    %304 = vmatprep.subr.mxu0 0.0
    %305 = vmatpush1.msra.mxu0 %v66
    %306 = vmatprep.subr.mxu0 0.0
    %307 = vmatpush1.msra.mxu0 %v65
    %308 = vmatprep.subr.mxu0 0.0
    %309 = vmatpush1.msra.mxu0 %v64
    %310 = vmatprep.subr.mxu0 0.0
    %311 = vmatpush1.msra.mxu0 %v63
    %312 = vmatprep.subr.mxu0 0.0
    %313 = vmatpush2.msra.mxu0 %v94
    %314 = vmatprep.subr.mxu0 0.0
    %315 = vmatpush2.msra.mxu0 %v93
    %316 = vmatprep.subr.mxu0 0.0
    %317 = vmatpush2.msra.mxu0 %v92
    %318 = vmatprep.subr.mxu0 0.0
    %319 = vmatpush2.msra.mxu0 %v91
    %320 = vmatprep.subr.mxu0 0.0
    %321 = vmatpush2.msra.mxu0 %v90
    %322 = vmatprep.subr.mxu0 0.0
    %323 = vmatpush2.msra.mxu0 %v89
    %324 = vmatprep.subr.mxu0 0.0
    %325 = vmatpush2.msra.mxu0 %v88
    %326 = vmatprep.subr.mxu0 0.0
    %327 = vmatpush2.msra.mxu0 %v87
    %328 = vmatprep.subr.mxu0 0.0
    %329 = vmatpush2.msra.mxu0 %v86
    %330 = vmatprep.subr.mxu0 0.0
    %331 = vmatpush2.msra.mxu0 %v85
    %332 = vmatprep.subr.mxu0 0.0
    %333 = vmatpush2.msra.mxu0 %v84
    %334 = vmatprep.subr.mxu0 0.0
    %335 = vmatpush2.msra.mxu0 %v83
    %336 = vmatprep.subr.mxu0 0.0
    %337 = vmatpush2.msra.mxu0 %v82
    %338 = vmatprep.subr.mxu0 0.0
    %339 = vmatpush2.msra.mxu0 %v81
    %340 = vmatprep.subr.mxu0 0.0
    %341 = vmatpush2.msra.mxu0 %v80
    %342 = vmatprep.subr.mxu0 0.0
    %343 = vmatpush2.msra.mxu0 %v79
    %344 = vmatprep.mubr.f32.mxu0 %v184
    %345 = vmatmul.mubr.f32.gmra.mxu0 %v182
    %v346 = vpop.f32.mrf.mxu0
    %v347 = vadd.f32 %v277, %v346
    %v348 = vpop.f32.mrf.mxu0
    %349 = vdwg.mxu0
    %350 = vmatprep.subr.mxu0 0.0
    %351 = vmatpush1.msra.mxu0 %v110
    %352 = vmatprep.subr.mxu0 0.0
    %353 = vmatpush1.msra.mxu0 %v109
    %354 = vmatprep.subr.mxu0 0.0
    %355 = vmatpush1.msra.mxu0 %v108
    %356 = vmatprep.subr.mxu0 0.0
    %357 = vmatpush1.msra.mxu0 %v107
    %358 = vmatprep.subr.mxu0 0.0
    %359 = vmatpush1.msra.mxu0 %v106
    %360 = vmatprep.subr.mxu0 0.0
    %361 = vmatpush1.msra.mxu0 %v105
    %362 = vmatprep.subr.mxu0 0.0
    %363 = vmatpush1.msra.mxu0 %v104
    %364 = vmatprep.subr.mxu0 0.0
    %365 = vmatpush1.msra.mxu0 %v103
    %366 = vmatprep.subr.mxu0 0.0
    %367 = vmatpush1.msra.mxu0 %v102
    %368 = vmatprep.subr.mxu0 0.0
    %369 = vmatpush1.msra.mxu0 %v101
    %370 = vmatprep.subr.mxu0 0.0
    %371 = vmatpush1.msra.mxu0 %v100
    %372 = vmatprep.subr.mxu0 0.0
    %373 = vmatpush1.msra.mxu0 %v99
    %374 = vmatprep.subr.mxu0 0.0
    %375 = vmatpush1.msra.mxu0 %v98
    %376 = vmatprep.subr.mxu0 0.0
    %377 = vmatpush1.msra.mxu0 %v97
    %378 = vmatprep.subr.mxu0 0.0
    %379 = vmatpush1.msra.mxu0 %v96
    %380 = vmatprep.subr.mxu0 0.0
    %381 = vmatpush1.msra.mxu0 %v95
    %382 = vmatprep.subr.mxu0 0.0
    %383 = vmatpush2.msra.mxu0 %v126
    %384 = vmatprep.subr.mxu0 0.0
    %385 = vmatpush2.msra.mxu0 %v125
    %386 = vmatprep.subr.mxu0 0.0
    %387 = vmatpush2.msra.mxu0 %v124
    %388 = vmatprep.subr.mxu0 0.0
    %389 = vmatpush2.msra.mxu0 %v123
    %390 = vmatprep.subr.mxu0 0.0
    %391 = vmatpush2.msra.mxu0 %v122
    %392 = vmatprep.subr.mxu0 0.0
    %393 = vmatpush2.msra.mxu0 %v121
    %394 = vmatprep.subr.mxu0 0.0
    %395 = vmatpush2.msra.mxu0 %v120
    %396 = vmatprep.subr.mxu0 0.0
    %397 = vmatpush2.msra.mxu0 %v119
    %398 = vmatprep.subr.mxu0 0.0
    %399 = vmatpush2.msra.mxu0 %v118
    %400 = vmatprep.subr.mxu0 0.0
    %401 = vmatpush2.msra.mxu0 %v117
    %402 = vmatprep.subr.mxu0 0.0
    %403 = vmatpush2.msra.mxu0 %v116
    %404 = vmatprep.subr.mxu0 0.0
    %405 = vmatpush2.msra.mxu0 %v115
    %406 = vmatprep.subr.mxu0 0.0
    %407 = vmatpush2.msra.mxu0 %v114
    %408 = vmatprep.subr.mxu0 0.0
    %409 = vmatpush2.msra.mxu0 %v113
    %410 = vmatprep.subr.mxu0 0.0
    %411 = vmatpush2.msra.mxu0 %v112
    %412 = vmatprep.subr.mxu0 0.0
    %413 = vmatpush2.msra.mxu0 %v111
    %414 = vmatprep.mubr.f32.mxu0 %v200
    %415 = vmatmul.mubr.f32.gmra.mxu0 %v192
    %v416 = vpop.f32.mrf.mxu0
    %v417 = vadd.f32 %v347, %v416
    %v418 = vpop.f32.mrf.mxu0
    %419 = vdwg.mxu0
    %420 = vmatprep.subr.mxu0 0.0
    %421 = vmatpush1.msra.mxu0 %v142
    %422 = vmatprep.subr.mxu0 0.0
    %423 = vmatpush1.msra.mxu0 %v141
    %424 = vmatprep.subr.mxu0 0.0
    %425 = vmatpush1.msra.mxu0 %v140
    %426 = vmatprep.subr.mxu0 0.0
    %427 = vmatpush1.msra.mxu0 %v139
    %428 = vmatprep.subr.mxu0 0.0
    %429 = vmatpush1.msra.mxu0 %v138
    %430 = vmatprep.subr.mxu0 0.0
    %431 = vmatpush1.msra.mxu0 %v137
    %432 = vmatprep.subr.mxu0 0.0
    %433 = vmatpush1.msra.mxu0 %v136
    %434 = vmatprep.subr.mxu0 0.0
    %435 = vmatpush1.msra.mxu0 %v135
    %436 = vmatprep.subr.mxu0 0.0
    %437 = vmatpush1.msra.mxu0 %v134
    %438 = vmatprep.subr.mxu0 0.0
    %439 = vmatpush1.msra.mxu0 %v133
    %440 = vmatprep.subr.mxu0 0.0
    %441 = vmatpush1.msra.mxu0 %v132
    %442 = vmatprep.subr.mxu0 0.0
    %443 = vmatpush1.msra.mxu0 %v131
    %444 = vmatprep.subr.mxu0 0.0
    %445 = vmatpush1.msra.mxu0 %v130
    %446 = vmatprep.subr.mxu0 0.0
    %447 = vmatpush1.msra.mxu0 %v129
    %448 = vmatprep.subr.mxu0 0.0
    %449 = vmatpush1.msra.mxu0 %v128
    %450 = vmatprep.subr.mxu0 0.0
    %451 = vmatpush1.msra.mxu0 %v127
    %452 = vmatprep.subr.mxu0 0.0
    %453 = vmatpush2.msra.mxu0 %v158
    %454 = vmatprep.subr.mxu0 0.0
    %455 = vmatpush2.msra.mxu0 %v157
    %456 = vmatprep.subr.mxu0 0.0
    %457 = vmatpush2.msra.mxu0 %v156
    %458 = vmatprep.subr.mxu0 0.0
    %459 = vmatpush2.msra.mxu0 %v155
    %460 = vmatprep.subr.mxu0 0.0
    %461 = vmatpush2.msra.mxu0 %v154
    %462 = vmatprep.subr.mxu0 0.0
    %463 = vmatpush2.msra.mxu0 %v153
    %464 = vmatprep.subr.mxu0 0.0
    %465 = vmatpush2.msra.mxu0 %v152
    %466 = vmatprep.subr.mxu0 0.0
    %467 = vmatpush2.msra.mxu0 %v151
    %468 = vmatprep.subr.mxu0 0.0
    %469 = vmatpush2.msra.mxu0 %v150
    %470 = vmatprep.subr.mxu0 0.0
    %471 = vmatpush2.msra.mxu0 %v149
    %472 = vmatprep.subr.mxu0 0.0
    %473 = vmatpush2.msra.mxu0 %v148
    %474 = vmatprep.subr.mxu0 0.0
    %475 = vmatpush2.msra.mxu0 %v147
    %476 = vmatprep.subr.mxu0 0.0
    %477 = vmatpush2.msra.mxu0 %v146
    %478 = vmatprep.subr.mxu0 0.0
    %479 = vmatpush2.msra.mxu0 %v145
    %480 = vmatprep.subr.mxu0 0.0
    %481 = vmatpush2.msra.mxu0 %v144
    %482 = vmatprep.subr.mxu0 0.0
    %483 = vmatpush2.msra.mxu0 %v143
    %484 = vmatprep.mubr.f32.mxu0 %v201
    %485 = vmatmul.mubr.f32.gmra.mxu0 %v199
    %v486 = vpop.f32.mrf.mxu0
    %v487 = vadd.f32 %v417, %v486
    %v488 = vpop.f32.mrf.mxu0
    %489 = vdwg.mxu0
    %490 = vst [vmem:[#allocation5] sm:$0x3] %v487
    // Predicated region
    $region18: #{logistic_regression_forward.1} parent=1 // pred_check
      _
    $region19: #{logistic_regression_forward.1} parent=1 // pred_check_branch
      %492 = sbr.rel (0) target = $region21
    $region20: #{logistic_regression_forward.1} parent=1 // pred_region
      %s494 = ssub.s32 32, 32
      %495 = vsyncadd [#allocation4], %s494
      %s497 = sshll.u32 [#allocation5], 4
      %s498 = int_to_ptr.vmem [resolvable:$true] %s497
      %500 = dma.vmem_to_hbm [thread:$0]  %s498, 32, %s3, [#allocation4]
    $region21: #{logistic_regression_forward.1} parent=1 // pred_fallthru
      _
    // Predicated region
    $region22: #{logistic_regression_forward.1} parent=1 // pred_check
      _
    $region23: #{logistic_regression_forward.1} parent=1 // pred_check_branch
      %502 = sbr.rel (0) target = $region25
    $region24: #{logistic_regression_forward.1} parent=1 // pred_region
      %503 = dma.done [#allocation4], 32
    $region25: #{logistic_regression_forward.1} parent=1 // pred_fallthru
      _
    %504 = vsyncpa [#allocation3], 1
    %505 = vsyncpa [#allocation4], 1

</llo_original>
